<compile_context>
chip_gen: v6e
topology: v6e:2x2x1
jax: 0.10.0
libtpu: 0.0.40
codegen_flags: <defaults>
</compile_context>

<pallas_src>
import math
import jax
import jax.numpy as jnp
from jax.experimental import pallas as pl
from jax.experimental.pallas import tpu as pltpu


def _elu(x):
    # ELU(alpha=1); exp arg clamped so the discarded branch (and padded garbage
    # rows of a partial batch block) can never overflow.
    return jnp.where(x > 0, x, jnp.exp(jnp.minimum(x, 0.0)) - 1.0)


_ACTIVATIONS = {
    "elu": _elu,
    "relu": lambda x: jnp.maximum(x, 0.0),
    "tanh": jnp.tanh,
}


def _make_kernel(num_fc_layers, hidden, hidden_pad, out_size, std, act):
    L, H, HP, O = num_fc_layers, hidden, hidden_pad, out_size

    def kernel(x_ref, eps_ref, wx_ref, wr_ref, wrmu_ref, out_ref):
        # ONE lane-dense MXU pass: x-contribution + c-contribution (layer 0) +
        # bias of every fc layer and of the mu head.  Column block i starts at
        # lane offset i*HP (128-aligned), so the per-layer slices below are
        # cheap leading-lane views of a vreg tile.
        xp = jnp.dot(x_ref[...], wx_ref[...],
                     preferred_element_type=jnp.float32)        # (B, L*HP + O)

        # fc layer 0: Linear(cat([x, c])) lives entirely in the packed matmul.
        r = act(xp[:, 0:H])

        # fc layers 1..L-1: Linear(cat([x, res])) == packed x-part + res @ Wr_i
        for i in range(1, L):
            r = act(xp[:, i * HP:i * HP + H] +
                    jnp.dot(r, wr_ref[i - 1],
                            preferred_element_type=jnp.float32))

        # mu head (no activation)
        mu = xp[:, L * HP:L * HP + O] + jnp.dot(
            r, wrmu_ref[...], preferred_element_type=jnp.float32)

        # Packed output tile [mu | z]; std == var (log_var = 2*log(var)).
        out_ref[:, 0:O] = mu
        out_ref[:, O:2 * O] = mu + std * eps_ref[...]

    return kernel


def _pick_block_b(batch):
    """Largest batch block that amortizes per-step overhead, while leaving >=2
    grid steps for large batches so v7x's two TensorCores both run."""
    if batch <= 256:
        return batch
    per_core = -(-batch // 2)              # ceil(B/2)
    per_core = -(-per_core // 8) * 8       # round up to sublane multiple
    return min(1024, per_core)


def conditional_encoder_forward(x, c, eps, params, *, hidden_size,
                                hidden_layer_num, output_size, var,
                                activation="elu"):
    """Returns (z, mu), matching ConditionalEncoder.forward (var is not None)."""
    assert hidden_layer_num >= 1, "kernel packing assumes >=1 hidden layer"
    B, input_size = x.shape
    _, condition_size = c.shape
    L = hidden_layer_num + 1                 # number of fc layers
    H, O = hidden_size, output_size
    HP = -(-H // 128) * 128                  # 128-lane-aligned column block
    K = input_size + 1 + condition_size      # rows: x | ones (bias) | c
    N = L * HP + O

    f32 = jnp.float32

    # ---- host-side weight packing (plain XLA, done once per call) ----------
    wx = jnp.zeros((K, N), f32)
    # layer 0: x-rows + bias row + c-rows all land in column block [0:H]
    W0, b0 = params["W0"].astype(f32), params["b0"].astype(f32)
    wx = wx.at[0:input_size, 0:H].set(W0[:input_size])
    wx = wx.at[input_size, 0:H].set(b0)
    wx = wx.at[input_size + 1:K, 0:H].set(W0[input_size:])

    wr_list = []
    for j in range(1, L):
        Wj, bj = params[f"W{j}"].astype(f32), params[f"b{j}"].astype(f32)
        col = j * HP
        wx = wx.at[0:input_size, col:col + H].set(Wj[:input_size])
        wx = wx.at[input_size, col:col + H].set(bj)
        wr_list.append(Wj[input_size:])                        # (H, H)
    wr = jnp.stack(wr_list, axis=0)                            # (L-1, H, H)

    Wmu, bmu = params["Wmu"].astype(f32), params["bmu"].astype(f32)
    col = L * HP
    wx = wx.at[0:input_size, col:col + O].set(Wmu[:input_size])
    wx = wx.at[input_size, col:col + O].set(bmu)
    wr_mu = Wmu[input_size:]                                   # (H, O)

    # ones column folds every bias into the single packed matmul
    x_aug = jnp.concatenate(
        [x.astype(f32), jnp.ones((B, 1), f32), c.astype(f32)], axis=-1)
    eps = eps.astype(f32)

    # ---- grid / specs -------------------------------------------------------
    block_b = _pick_block_b(B)
    grid = (pl.cdiv(B, block_b),)

    in_specs = [
        pl.BlockSpec((block_b, K), lambda i: (i, 0)),          # x_aug = [x|1|c]
        pl.BlockSpec((block_b, O), lambda i: (i, 0)),          # eps
        pl.BlockSpec((K, N), lambda i: (0, 0)),                # packed Wx/bias/Wc
        pl.BlockSpec((L - 1, H, H), lambda i: (0, 0, 0)),      # res weights
        pl.BlockSpec((H, O), lambda i: (0, 0)),                # mu res weights
    ]
    out_specs = pl.BlockSpec((block_b, 2 * O), lambda i: (i, 0))   # [mu | z]

    act = _ACTIVATIONS[activation]
    out = pl.pallas_call(
        _make_kernel(L, H, HP, O, float(var), act),
        out_shape=jax.ShapeDtypeStruct((B, 2 * O), f32),
        grid=grid,
        in_specs=in_specs,
        out_specs=out_specs,
        compiler_params=pltpu.CompilerParams(
            dimension_semantics=("parallel",)),
    )(x_aug, eps, wx, wr, wr_mu)

    mu = out[:, :O]
    z = out[:, O:]
    return z, mu


# ---------------------------------------------------------------------------
# Parameter init (torch nn.Linear default: uniform +-1/sqrt(fan_in)),
# weights stored (in, out).
# ---------------------------------------------------------------------------
def init_params(key, input_size, condition_size, output_size, hidden_size,
                hidden_layer_num):
    L = hidden_layer_num + 1
    keys = jax.random.split(key, 2 * (L + 1))
    params = {}

    def uni(k, shape, fan_in):
        bound = 1.0 / math.sqrt(fan_in)
        return jax.random.uniform(k, shape, jnp.float32, -bound, bound)

    ki = 0
    din = input_size + condition_size
    params["W0"] = uni(keys[ki], (din, hidden_size), din); ki += 1
    params["b0"] = uni(keys[ki], (hidden_size,), din); ki += 1
    for j in range(1, L):
        din = input_size + hidden_size
        params[f"W{j}"] = uni(keys[ki], (din, hidden_size), din); ki += 1
        params[f"b{j}"] = uni(keys[ki], (hidden_size,), din); ki += 1
    din = input_size + hidden_size
    params["Wmu"] = uni(keys[ki], (din, output_size), din); ki += 1
    params["bmu"] = uni(keys[ki], (output_size,), din); ki += 1
    return params


def reference_forward(x, c, eps, params, hidden_layer_num, var):
    """Pure-JAX reference mirroring the torch forward (cat + Linear + ELU)."""
    L = hidden_layer_num + 1
    res = c
    for j in range(L):
        inp = jnp.concatenate([x, res], axis=-1)
        res = _elu(inp @ params[f"W{j}"] + params[f"b{j}"])
    latent = jnp.concatenate([x, res], axis=-1)
    mu = latent @ params["Wmu"] + params["bmu"]
    z = mu + var * eps          # std = exp(0.5 * 2*log(var)) = var
    return z, mu


if __name__ == "__main__":
    input_size = 16
    condition_size = 16
    output_size = 16
    hidden_size = 32
    hidden_layer_num = 2
    var = 0.3
    batch = 8

    key = jax.random.PRNGKey(0)
    kx, kc, ke, kp = jax.random.split(key, 4)
    x = jax.random.normal(kx, (batch, input_size), jnp.float32)
    c = jax.random.normal(kc, (batch, condition_size), jnp.float32)
    eps = jax.random.normal(ke, (batch, output_size), jnp.float32)
    params = init_params(kp, input_size, condition_size, output_size,
                         hidden_size, hidden_layer_num)

    z, mu = conditional_encoder_forward(
        x, c, eps, params, hidden_size=hidden_size,
        hidden_layer_num=hidden_layer_num, output_size=output_size, var=var)
    z = jax.block_until_ready(z)
    mu = jax.block_until_ready(mu)

    z_ref, mu_ref = reference_forward(x, c, eps, params, hidden_layer_num, var)
    z_ref = jax.block_until_ready(z_ref)
    mu_ref = jax.block_until_ready(mu_ref)

    assert z.shape == (batch, output_size) and mu.shape == (batch, output_size)
    assert jnp.allclose(mu, mu_ref, atol=1e-4, rtol=1e-4), (
        f"mu max abs err {jnp.max(jnp.abs(mu - mu_ref))}")
    assert jnp.allclose(z, z_ref, atol=1e-4, rtol=1e-4), (
        f"z max abs err {jnp.max(jnp.abs(z - z_ref))}")

    print("KERNEL_OK")
</pallas_src>

<mosaic_0001>
module attributes {stable_mosaic.version = 11 : i64} {
  func.func @kernel(%arg0: i32, %arg1: memref<8x33xf32, #tpu.memory_space<vmem>>, %arg2: memref<8x16xf32, #tpu.memory_space<vmem>>, %arg3: memref<33x400xf32, #tpu.memory_space<vmem>>, %arg4: memref<2x32x32xf32, #tpu.memory_space<vmem>>, %arg5: memref<32x16xf32, #tpu.memory_space<vmem>>, %arg6: memref<8x32xf32, #tpu.memory_space<vmem>>) attributes {dimension_semantics = [#tpu.dimension_semantics<parallel>], iteration_bounds = array<i64: 1>, scalar_prefetch = 0 : i64, scratch_operands = 0 : i64, tpu.core_type = #tpu.core_type<tc>, window_params = [{transform_indices = @transform_0, window_bounds = array<i64: 8, 33>}, {transform_indices = @transform_1, window_bounds = array<i64: 8, 16>}, {pipeline_mode = #tpu.pipeline_mode<synchronous>, transform_indices = @transform_2, window_bounds = array<i64: 33, 400>}, {pipeline_mode = #tpu.pipeline_mode<synchronous>, transform_indices = @transform_3, window_bounds = array<i64: 2, 32, 32>}, {pipeline_mode = #tpu.pipeline_mode<synchronous>, transform_indices = @transform_4, window_bounds = array<i64: 32, 16>}, {transform_indices = @transform_5, window_bounds = array<i64: 8, 32>}]} {
    %c0 = arith.constant 0 : index
    %c0_0 = arith.constant 0 : index
    %0 = vector.load %arg1[%c0, %c0_0] : memref<8x33xf32, #tpu.memory_space<vmem>>, vector<8x33xf32>
    %c0_1 = arith.constant 0 : index
    %c0_2 = arith.constant 0 : index
    %1 = vector.load %arg3[%c0_1, %c0_2] : memref<33x400xf32, #tpu.memory_space<vmem>>, vector<33x400xf32>
    %cst = arith.constant dense<0.000000e+00> : vector<8x400xf32>
    %2 = tpu.matmul %0, %1, %cst {dimension_numbers = #tpu.dot_dimension_numbers<[1], [0], [0], [1], [0, 0, 1, 1], [], []>} : vector<8x33xf32>, vector<33x400xf32>, vector<8x400xf32> -> vector<8x400xf32>
    %3 = vector.extract_strided_slice %2 {offsets = [0, 0], sizes = [8, 32], strides = [1, 1]} : vector<8x400xf32> to vector<8x32xf32>
    %cst_3 = arith.constant 0.000000e+00 : f32
    %4 = vector.broadcast %cst_3 : f32 to vector<8x32xf32>
    %5 = arith.cmpf ogt, %3, %4 : vector<8x32xf32>
    %cst_4 = arith.constant 0.000000e+00 : f32
    %6 = vector.broadcast %cst_4 : f32 to vector<8x32xf32>
    %7 = arith.minimumf %3, %6 : vector<8x32xf32>
    %8 = math.exp %7 : vector<8x32xf32>
    %cst_5 = arith.constant 1.000000e+00 : f32
    %9 = vector.broadcast %cst_5 : f32 to vector<8x32xf32>
    %10 = arith.subf %8, %9 : vector<8x32xf32>
    %11 = arith.select %5, %3, %10 : vector<8x32xi1>, vector<8x32xf32>
    %12 = vector.extract_strided_slice %2 {offsets = [0, 128], sizes = [8, 32], strides = [1, 1]} : vector<8x400xf32> to vector<8x32xf32>
    %c0_6 = arith.constant 0 : index
    %c0_7 = arith.constant 0 : index
    %c0_8 = arith.constant 0 : index
    %13 = vector.load %arg4[%c0_6, %c0_7, %c0_8] : memref<2x32x32xf32, #tpu.memory_space<vmem>>, vector<1x32x32xf32>
    %14 = vector.shape_cast %13 : vector<1x32x32xf32> to vector<32x32xf32>
    %cst_9 = arith.constant dense<0.000000e+00> : vector<8x32xf32>
    %15 = tpu.matmul %11, %14, %cst_9 {dimension_numbers = #tpu.dot_dimension_numbers<[1], [0], [0], [1], [0, 0, 1, 1], [], []>} : vector<8x32xf32>, vector<32x32xf32>, vector<8x32xf32> -> vector<8x32xf32>
    %16 = arith.addf %12, %15 : vector<8x32xf32>
    %cst_10 = arith.constant 0.000000e+00 : f32
    %17 = vector.broadcast %cst_10 : f32 to vector<8x32xf32>
    %18 = arith.cmpf ogt, %16, %17 : vector<8x32xf32>
    %cst_11 = arith.constant 0.000000e+00 : f32
    %19 = vector.broadcast %cst_11 : f32 to vector<8x32xf32>
    %20 = arith.minimumf %16, %19 : vector<8x32xf32>
    %21 = math.exp %20 : vector<8x32xf32>
    %cst_12 = arith.constant 1.000000e+00 : f32
    %22 = vector.broadcast %cst_12 : f32 to vector<8x32xf32>
    %23 = arith.subf %21, %22 : vector<8x32xf32>
    %24 = arith.select %18, %16, %23 : vector<8x32xi1>, vector<8x32xf32>
    %25 = vector.extract_strided_slice %2 {offsets = [0, 256], sizes = [8, 32], strides = [1, 1]} : vector<8x400xf32> to vector<8x32xf32>
    %c1 = arith.constant 1 : index
    %c0_13 = arith.constant 0 : index
    %c0_14 = arith.constant 0 : index
    %26 = vector.load %arg4[%c1, %c0_13, %c0_14] : memref<2x32x32xf32, #tpu.memory_space<vmem>>, vector<1x32x32xf32>
    %27 = vector.shape_cast %26 : vector<1x32x32xf32> to vector<32x32xf32>
    %cst_15 = arith.constant dense<0.000000e+00> : vector<8x32xf32>
    %28 = tpu.matmul %24, %27, %cst_15 {dimension_numbers = #tpu.dot_dimension_numbers<[1], [0], [0], [1], [0, 0, 1, 1], [], []>} : vector<8x32xf32>, vector<32x32xf32>, vector<8x32xf32> -> vector<8x32xf32>
    %29 = arith.addf %25, %28 : vector<8x32xf32>
    %cst_16 = arith.constant 0.000000e+00 : f32
    %30 = vector.broadcast %cst_16 : f32 to vector<8x32xf32>
    %31 = arith.cmpf ogt, %29, %30 : vector<8x32xf32>
    %cst_17 = arith.constant 0.000000e+00 : f32
    %32 = vector.broadcast %cst_17 : f32 to vector<8x32xf32>
    %33 = arith.minimumf %29, %32 : vector<8x32xf32>
    %34 = math.exp %33 : vector<8x32xf32>
    %cst_18 = arith.constant 1.000000e+00 : f32
    %35 = vector.broadcast %cst_18 : f32 to vector<8x32xf32>
    %36 = arith.subf %34, %35 : vector<8x32xf32>
    %37 = arith.select %31, %29, %36 : vector<8x32xi1>, vector<8x32xf32>
    %38 = vector.extract_strided_slice %2 {offsets = [0, 384], sizes = [8, 16], strides = [1, 1]} : vector<8x400xf32> to vector<8x16xf32>
    %c0_19 = arith.constant 0 : index
    %c0_20 = arith.constant 0 : index
    %39 = vector.load %arg5[%c0_19, %c0_20] : memref<32x16xf32, #tpu.memory_space<vmem>>, vector<32x16xf32>
    %cst_21 = arith.constant dense<0.000000e+00> : vector<8x16xf32>
    %40 = tpu.matmul %37, %39, %cst_21 {dimension_numbers = #tpu.dot_dimension_numbers<[1], [0], [0], [1], [0, 0, 1, 1], [], []>} : vector<8x32xf32>, vector<32x16xf32>, vector<8x16xf32> -> vector<8x16xf32>
    %41 = arith.addf %38, %40 : vector<8x16xf32>
    %c0_22 = arith.constant 0 : index
    %c0_23 = arith.constant 0 : index
    %42 = vector.load %arg6[%c0_22, %c0_23] : memref<8x32xf32, #tpu.memory_space<vmem>>, vector<8x16xf32>
    tpu.vector_store %arg6[%c0_22, %c0_23], %41 {strides = array<i32>} : memref<8x32xf32, #tpu.memory_space<vmem>>, vector<8x16xf32>,
    %c0_24 = arith.constant 0 : index
    %c0_25 = arith.constant 0 : index
    %43 = vector.load %arg2[%c0_24, %c0_25] : memref<8x16xf32, #tpu.memory_space<vmem>>, vector<8x16xf32>
    %cst_26 = arith.constant 3.000000e-01 : f32
    %44 = vector.broadcast %cst_26 : f32 to vector<8x16xf32>
    %45 = arith.mulf %44, %43 : vector<8x16xf32>
    %46 = arith.addf %41, %45 : vector<8x16xf32>
    %c0_27 = arith.constant 0 : index
    %c16 = arith.constant 16 : index
    %47 = vector.load %arg6[%c0_27, %c16] : memref<8x32xf32, #tpu.memory_space<vmem>>, vector<8x16xf32>
    tpu.vector_store %arg6[%c0_27, %c16], %46 {strides = array<i32>} : memref<8x32xf32, #tpu.memory_space<vmem>>, vector<8x16xf32>,
    return
  }
  func.func @transform_0(%arg0: i32) -> (i32, i32) {
    %c0_i32 = arith.constant 0 : i32
    %c0_i32_0 = arith.constant 0 : i32
    return %arg0, %c0_i32 : i32, i32
  }
  func.func @transform_1(%arg0: i32) -> (i32, i32) {
    %c0_i32 = arith.constant 0 : i32
    %c0_i32_0 = arith.constant 0 : i32
    return %arg0, %c0_i32 : i32, i32
  }
  func.func @transform_2(%arg0: i32) -> (i32, i32) {
    %c0_i32 = arith.constant 0 : i32
    %c0_i32_0 = arith.constant 0 : i32
    %c0_i32_1 = arith.constant 0 : i32
    return %c0_i32, %c0_i32_0 : i32, i32
  }
  func.func @transform_3(%arg0: i32) -> (i32, i32, i32) {
    %c0_i32 = arith.constant 0 : i32
    %c0_i32_0 = arith.constant 0 : i32
    %c0_i32_1 = arith.constant 0 : i32
    %c0_i32_2 = arith.constant 0 : i32
    return %c0_i32, %c0_i32_0, %c0_i32_1 : i32, i32, i32
  }
  func.func @transform_4(%arg0: i32) -> (i32, i32) {
    %c0_i32 = arith.constant 0 : i32
    %c0_i32_0 = arith.constant 0 : i32
    %c0_i32_1 = arith.constant 0 : i32
    return %c0_i32, %c0_i32_0 : i32, i32
  }
  func.func @transform_5(%arg0: i32) -> (i32, i32) {
    %c0_i32 = arith.constant 0 : i32
    %c0_i32_0 = arith.constant 0 : i32
    return %arg0, %c0_i32 : i32, i32
  }
}

</mosaic_0001>

<llo_original>
// kernel: tpu_custom_call.1
$region0: #{tpu_custom_call.1}
  #allocation0 [shape = 'u32[]', space=smem, size = 0x4, offset = 0x4, fixed_abs, tag = 'smem constant byte address 0x4 - core index']
  #allocation1 [shape = 'u32[144,128]{1,0:T(1,128)}', space=vmem, size = 0x12000, scoped, tag = 'internal scratch']
  %s0 = inlined_call_operand.vmem [shape: f32[8,33], index: 0, kind: input, shape index: {}]
  %s1 = inlined_call_operand.vmem [shape: f32[8,16], index: 1, kind: input, shape index: {}]
  %s2 = inlined_call_operand.hbm [shape: f32[33,400], index: 2, kind: input, shape index: {}]
  %s3 = inlined_call_operand.hbm [shape: f32[2,32,32], index: 3, kind: input, shape index: {}]
  %s4 = inlined_call_operand.vmem [shape: f32[32,16], index: 4, kind: input, shape index: {}]
  %s5 = inlined_call_operand.hbm [shape: f32[8,32], index: 5, kind: output, shape index: {}]
  %s6 = sld [smem:[#allocation0]]
  $region38: #{tpu_custom_call.1} parent=0
    _
  %s8 = ssub.s32 1, %s6
  %s9 = scalar_select 0, %s8, %s6
  $region1: #{tpu_custom_call.1} parent=0
    #allocation2 [shape = 'u8[81920]{0}', space=vmem, size = 0x14000, scoped, tag = 'input window, operand 2, single buffered']
    #allocation3 [shape = 's32[1]{0}', space=sflag, size = 0x4, scoped, tag = 'scoped memory for tpu_custom_call.1']
    #allocation4 [shape = 's32[1]{0}', space=sflag, size = 0x4, scoped, tag = 'scoped memory for tpu_custom_call.1']
    #allocation5 [shape = 'u8[32768]{0}', space=vmem, size = 0x8000, scoped, tag = 'input window, operand 3, single buffered']
    #allocation6 [shape = 's32[1]{0}', space=sflag, size = 0x4, scoped, tag = 'scoped memory for tpu_custom_call.1']
    #allocation7 [shape = 'u8[4096]{0}', space=vmem, size = 0x1000, scoped, tag = 'output window, operand 0, single buffered']
    %10 = vsyncpa [#allocation3], 0
    %11 = vsyncpa [#allocation6], 0
    %12 = vsyncpa [#allocation4], 0
    // Predicated region
    $region2: #{tpu_custom_call.1} parent=1 // pred_check
      _
    $region3: #{tpu_custom_call.1} parent=1 // pred_check_branch
      %14 = sbr.rel (0) target = $region5
    $region4: #{tpu_custom_call.1} parent=1 // pred_region
      _
    $region5: #{tpu_custom_call.1} parent=1 // pred_fallthru
      _
    // Predicated region
    $region6: #{tpu_custom_call.1} parent=1 // pred_check
      _
    $region7: #{tpu_custom_call.1} parent=1 // pred_check_branch
      %16 = sbr.rel (0) target = $region9
    $region8: #{tpu_custom_call.1} parent=1 // pred_region
      _
    $region9: #{tpu_custom_call.1} parent=1 // pred_fallthru
      _
    // Predicated region
    $region10: #{tpu_custom_call.1} parent=1 // pred_check
      _
    $region11: #{tpu_custom_call.1} parent=1 // pred_check_branch
      %18 = sbr.rel (0) target = $region13
    $region12: #{tpu_custom_call.1} parent=1 // pred_region
      %s20 = ssub.s32 2560, 2560
      %21 = vsyncadd [#allocation3], %s20
      %s22 = sshll.u32 [#allocation2], 4
      %s23 = int_to_ptr.vmem [resolvable:$true] %s22
      %28 = dma.hbm_to_vmem [thread:$0]  %s2, 2560, %s23, [#allocation3], 512, 512, 32
    $region13: #{tpu_custom_call.1} parent=1 // pred_fallthru
      _
    // Predicated region
    $region14: #{tpu_custom_call.1} parent=1 // pred_check
      _
    $region15: #{tpu_custom_call.1} parent=1 // pred_check_branch
      %30 = sbr.rel (0) target = $region17
    $region16: #{tpu_custom_call.1} parent=1 // pred_region
      %s32 = ssub.s32 1024, 1024
      %33 = vsyncadd [#allocation6], %s32
      %s34 = sshll.u32 [#allocation5], 4
      %s35 = int_to_ptr.vmem [resolvable:$true] %s34
      %40 = dma.hbm_to_vmem [thread:$0]  %s3, 1024, %s35, [#allocation6], 128, 128, 8
    $region17: #{tpu_custom_call.1} parent=1 // pred_fallthru
      _
    // Predicated region
    $region18: #{tpu_custom_call.1} parent=1 // pred_check
      _
    $region19: #{tpu_custom_call.1} parent=1 // pred_check_branch
      %42 = sbr.rel (0) target = $region21
    $region20: #{tpu_custom_call.1} parent=1 // pred_region
      _
    $region21: #{tpu_custom_call.1} parent=1 // pred_fallthru
      _
    // Predicated region
    $region22: #{tpu_custom_call.1} parent=1 // pred_check
      _
    $region23: #{tpu_custom_call.1} parent=1 // pred_check_branch
      %44 = sbr.rel (0) target = $region25
    $region24: #{tpu_custom_call.1} parent=1 // pred_region
      %45 = dma.done [#allocation3], 2560
    $region25: #{tpu_custom_call.1} parent=1 // pred_fallthru
      _
    // Predicated region
    $region26: #{tpu_custom_call.1} parent=1 // pred_check
      _
    $region27: #{tpu_custom_call.1} parent=1 // pred_check_branch
      %47 = sbr.rel (0) target = $region29
    $region28: #{tpu_custom_call.1} parent=1 // pred_region
      %48 = dma.done [#allocation6], 1024
    $region29: #{tpu_custom_call.1} parent=1 // pred_fallthru
      _
    %v49 = vld [vmem:[%s0] sm:$0xff]
    %v50 = vld [vmem:[#allocation2] sm:$0xff]
    %v51 = vld [vmem:[#allocation2 + $0x8] sm:$0xff]
    %v52 = vld [vmem:[#allocation2 + $0x10] sm:$0xff]
    %v53 = vld [vmem:[#allocation2 + $0x18] sm:$0xff]
    %v54 = vld [vmem:[#allocation2 + $0x20] sm:$0xff]
    %v55 = vld [vmem:[#allocation2 + $0x28] sm:$0xff]
    %v56 = vld [vmem:[#allocation2 + $0x30] sm:$0xff]
    %v57 = vld [vmem:[#allocation2 + $0x38] sm:$0xff]
    %v58 = vld [vmem:[#allocation2 + $0x40] sm:$0xff]
    %v59 = vld [vmem:[#allocation2 + $0x48] sm:$0xff]
    %v60 = vld [vmem:[#allocation2 + $0x50] sm:$0xff]
    %v61 = vld [vmem:[#allocation2 + $0x58] sm:$0xff]
    %v62 = vld [vmem:[#allocation2 + $0x60] sm:$0xff]
    %v63 = vld [vmem:[#allocation2 + $0x68] sm:$0xff]
    %v64 = vld [vmem:[#allocation2 + $0x70] sm:$0xff]
    %v65 = vld [vmem:[#allocation2 + $0x78] sm:$0xff]
    %v66 = vld [vmem:[#allocation2 + $0x80] sm:$0x1]
    %v67 = vld [vmem:[#allocation2 + $0x88] sm:$0x1]
    %v68 = vld [vmem:[#allocation2 + $0x90] sm:$0x1]
    %v69 = vld [vmem:[#allocation2 + $0x98] sm:$0x1]
    %vm70 = vcmask 269312
    %v72 = vsel %vm70, %v49, 0
    %vm74 = vcmask 1040384
    %v76 = vsel %vm74, %v66, 0
    %v79 = vsel %vm74, %v67, 0
    %v82 = vsel %vm74, %v68, 0
    %v85 = vsel %vm74, %v69, 0
    %87 = vmatprep.subr.mxu0 0.0
    %88 = vmatpush1.msra.mxu0 0.0
    %89 = vmatprep.subr.mxu0 0.0
    %90 = vmatpush1.msra.mxu0 0.0
    %91 = vmatprep.subr.mxu0 0.0
    %92 = vmatpush1.msra.mxu0 0.0
    %93 = vmatprep.subr.mxu0 0.0
    %94 = vmatpush1.msra.mxu0 0.0
    %95 = vmatprep.subr.mxu0 0.0
    %96 = vmatpush1.msra.mxu0 0.0
    %97 = vmatprep.subr.mxu0 0.0
    %98 = vmatpush1.msra.mxu0 0.0
    %99 = vmatprep.subr.mxu0 0.0
    %100 = vmatpush1.msra.mxu0 0.0
    %101 = vmatprep.subr.mxu0 0.0
    %102 = vmatpush1.msra.mxu0 0.0
    %103 = vmatprep.subr.mxu0 0.0
    %104 = vmatpush1.msra.mxu0 0.0
    %105 = vmatprep.subr.mxu0 0.0
    %106 = vmatpush1.msra.mxu0 0.0
    %107 = vmatprep.subr.mxu0 0.0
    %108 = vmatpush1.msra.mxu0 0.0
    %109 = vmatprep.subr.mxu0 %v79
    %110 = vmatpush1.msra.mxu0 %v76
    %111 = vmatprep.subr.mxu0 %v63
    %112 = vmatpush1.msra.mxu0 %v62
    %113 = vmatprep.subr.mxu0 %v59
    %114 = vmatpush1.msra.mxu0 %v58
    %115 = vmatprep.subr.mxu0 %v55
    %116 = vmatpush1.msra.mxu0 %v54
    %117 = vmatprep.subr.mxu0 %v51
    %118 = vmatpush1.msra.mxu0 %v50
    %119 = vmatprep.subr.mxu0 0.0
    %120 = vmatpush2.msra.mxu0 0.0
    %121 = vmatprep.subr.mxu0 0.0
    %122 = vmatpush2.msra.mxu0 0.0
    %123 = vmatprep.subr.mxu0 0.0
    %124 = vmatpush2.msra.mxu0 0.0
    %125 = vmatprep.subr.mxu0 0.0
    %126 = vmatpush2.msra.mxu0 0.0
    %127 = vmatprep.subr.mxu0 0.0
    %128 = vmatpush2.msra.mxu0 0.0
    %129 = vmatprep.subr.mxu0 0.0
    %130 = vmatpush2.msra.mxu0 0.0
    %131 = vmatprep.subr.mxu0 0.0
    %132 = vmatpush2.msra.mxu0 0.0
    %133 = vmatprep.subr.mxu0 0.0
    %134 = vmatpush2.msra.mxu0 0.0
    %135 = vmatprep.subr.mxu0 0.0
    %136 = vmatpush2.msra.mxu0 0.0
    %137 = vmatprep.subr.mxu0 0.0
    %138 = vmatpush2.msra.mxu0 0.0
    %139 = vmatprep.subr.mxu0 0.0
    %140 = vmatpush2.msra.mxu0 0.0
    %141 = vmatprep.subr.mxu0 0.0
    %142 = vmatpush2.msra.mxu0 0.0
    %143 = vmatprep.subr.mxu0 0.0
    %144 = vmatpush2.msra.mxu0 0.0
    %145 = vmatprep.subr.mxu0 0.0
    %146 = vmatpush2.msra.mxu0 0.0
    %147 = vmatprep.subr.mxu0 0.0
    %148 = vmatpush2.msra.mxu0 0.0
    %149 = vmatprep.subr.mxu0 0.0
    %150 = vmatpush2.msra.mxu0 0.0
    %151 = vmatprep.mubr.f32.mxu0 0.0
    %152 = vmatmul.mubr.f32.gmra.mxu0 %v72
    %v153 = vpop.f32.mrf.mxu0
    %v154 = vadd.f32 0.0, %v153
    %v155 = vpop.f32.mrf.mxu0
    %v156 = vadd.f32 0.0, %v155
    %157 = vdwg.mxu0
    %158 = vmatprep.subr.mxu0 0.0
    %159 = vmatpush1.msra.mxu0 0.0
    %160 = vmatprep.subr.mxu0 0.0
    %161 = vmatpush1.msra.mxu0 0.0
    %162 = vmatprep.subr.mxu0 0.0
    %163 = vmatpush1.msra.mxu0 0.0
    %164 = vmatprep.subr.mxu0 0.0
    %165 = vmatpush1.msra.mxu0 0.0
    %166 = vmatprep.subr.mxu0 0.0
    %167 = vmatpush1.msra.mxu0 0.0
    %168 = vmatprep.subr.mxu0 0.0
    %169 = vmatpush1.msra.mxu0 0.0
    %170 = vmatprep.subr.mxu0 0.0
    %171 = vmatpush1.msra.mxu0 0.0
    %172 = vmatprep.subr.mxu0 0.0
    %173 = vmatpush1.msra.mxu0 0.0
    %174 = vmatprep.subr.mxu0 0.0
    %175 = vmatpush1.msra.mxu0 0.0
    %176 = vmatprep.subr.mxu0 0.0
    %177 = vmatpush1.msra.mxu0 0.0
    %178 = vmatprep.subr.mxu0 0.0
    %179 = vmatpush1.msra.mxu0 0.0
    %180 = vmatprep.subr.mxu0 %v85
    %181 = vmatpush1.msra.mxu0 %v82
    %182 = vmatprep.subr.mxu0 %v65
    %183 = vmatpush1.msra.mxu0 %v64
    %184 = vmatprep.subr.mxu0 %v61
    %185 = vmatpush1.msra.mxu0 %v60
    %186 = vmatprep.subr.mxu0 %v57
    %187 = vmatpush1.msra.mxu0 %v56
    %188 = vmatprep.subr.mxu0 %v53
    %189 = vmatpush1.msra.mxu0 %v52
    %190 = vmatprep.subr.mxu0 0.0
    %191 = vmatpush2.msra.mxu0 0.0
    %192 = vmatprep.subr.mxu0 0.0
    %193 = vmatpush2.msra.mxu0 0.0
    %194 = vmatprep.subr.mxu0 0.0
    %195 = vmatpush2.msra.mxu0 0.0
    %196 = vmatprep.subr.mxu0 0.0
    %197 = vmatpush2.msra.mxu0 0.0
    %198 = vmatprep.subr.mxu0 0.0
    %199 = vmatpush2.msra.mxu0 0.0
    %200 = vmatprep.subr.mxu0 0.0
    %201 = vmatpush2.msra.mxu0 0.0
    %202 = vmatprep.subr.mxu0 0.0
    %203 = vmatpush2.msra.mxu0 0.0
    %204 = vmatprep.subr.mxu0 0.0
    %205 = vmatpush2.msra.mxu0 0.0
    %206 = vmatprep.subr.mxu0 0.0
    %207 = vmatpush2.msra.mxu0 0.0
    %208 = vmatprep.subr.mxu0 0.0
    %209 = vmatpush2.msra.mxu0 0.0
    %210 = vmatprep.subr.mxu0 0.0
    %211 = vmatpush2.msra.mxu0 0.0
    %212 = vmatprep.subr.mxu0 0.0
    %213 = vmatpush2.msra.mxu0 0.0
    %214 = vmatprep.subr.mxu0 0.0
    %215 = vmatpush2.msra.mxu0 0.0
    %216 = vmatprep.subr.mxu0 0.0
    %217 = vmatpush2.msra.mxu0 0.0
    %218 = vmatprep.subr.mxu0 0.0
    %219 = vmatpush2.msra.mxu0 0.0
    %220 = vmatprep.subr.mxu0 0.0
    %221 = vmatpush2.msra.mxu0 0.0
    %222 = vmatprep.mubr.f32.mxu0 0.0
    %223 = vmatmul.mubr.f32.gmra.mxu0 %v72
    %v224 = vpop.f32.mrf.mxu0
    %v225 = vadd.f32 0.0, %v224
    %v226 = vpop.f32.mrf.mxu0
    %v227 = vadd.f32 0.0, %v226
    %228 = vdwg.mxu0
    %vm229 = vcmp.gt.f32.partialorder %v154, 0.0
    %v230 = vmin.f32 %v154, 0.0
    %v231 = vmul.f32 %v230, 1.442695
    %v232 = vpow.pop %v231
    %v233 = vsub.f32 %v232, 1.0
    %v234 = vsel %vm229, %v154, %v233
    %v235 = vld [vmem:[#allocation5] sm:$0xff]
    %v236 = vld [vmem:[#allocation5 + $0x8] sm:$0xff]
    %v237 = vld [vmem:[#allocation5 + $0x10] sm:$0xff]
    %v238 = vld [vmem:[#allocation5 + $0x18] sm:$0xff]
    %vm239 = vcmask 261120
    %v241 = vsel %vm239, %v234, 0
    %243 = vmatprep.subr.mxu0 0.0
    %244 = vmatpush1.msra.mxu0 0.0
    %245 = vmatprep.subr.mxu0 0.0
    %246 = vmatpush1.msra.mxu0 0.0
    %247 = vmatprep.subr.mxu0 0.0
    %248 = vmatpush1.msra.mxu0 0.0
    %249 = vmatprep.subr.mxu0 0.0
    %250 = vmatpush1.msra.mxu0 0.0
    %251 = vmatprep.subr.mxu0 0.0
    %252 = vmatpush1.msra.mxu0 0.0
    %253 = vmatprep.subr.mxu0 0.0
    %254 = vmatpush1.msra.mxu0 0.0
    %255 = vmatprep.subr.mxu0 0.0
    %256 = vmatpush1.msra.mxu0 0.0
    %257 = vmatprep.subr.mxu0 0.0
    %258 = vmatpush1.msra.mxu0 0.0
    %259 = vmatprep.subr.mxu0 0.0
    %260 = vmatpush1.msra.mxu0 0.0
    %261 = vmatprep.subr.mxu0 0.0
    %262 = vmatpush1.msra.mxu0 0.0
    %263 = vmatprep.subr.mxu0 0.0
    %264 = vmatpush1.msra.mxu0 0.0
    %265 = vmatprep.subr.mxu0 0.0
    %266 = vmatpush1.msra.mxu0 0.0
    %267 = vmatprep.subr.mxu0 0.0
    %268 = vmatpush1.msra.mxu0 %v238
    %269 = vmatprep.subr.mxu0 0.0
    %270 = vmatpush1.msra.mxu0 %v237
    %271 = vmatprep.subr.mxu0 0.0
    %272 = vmatpush1.msra.mxu0 %v236
    %273 = vmatprep.subr.mxu0 0.0
    %274 = vmatpush1.msra.mxu0 %v235
    %275 = vmatprep.subr.mxu0 0.0
    %276 = vmatpush2.msra.mxu0 0.0
    %277 = vmatprep.subr.mxu0 0.0
    %278 = vmatpush2.msra.mxu0 0.0
    %279 = vmatprep.subr.mxu0 0.0
    %280 = vmatpush2.msra.mxu0 0.0
    %281 = vmatprep.subr.mxu0 0.0
    %282 = vmatpush2.msra.mxu0 0.0
    %283 = vmatprep.subr.mxu0 0.0
    %284 = vmatpush2.msra.mxu0 0.0
    %285 = vmatprep.subr.mxu0 0.0
    %286 = vmatpush2.msra.mxu0 0.0
    %287 = vmatprep.subr.mxu0 0.0
    %288 = vmatpush2.msra.mxu0 0.0
    %289 = vmatprep.subr.mxu0 0.0
    %290 = vmatpush2.msra.mxu0 0.0
    %291 = vmatprep.subr.mxu0 0.0
    %292 = vmatpush2.msra.mxu0 0.0
    %293 = vmatprep.subr.mxu0 0.0
    %294 = vmatpush2.msra.mxu0 0.0
    %295 = vmatprep.subr.mxu0 0.0
    %296 = vmatpush2.msra.mxu0 0.0
    %297 = vmatprep.subr.mxu0 0.0
    %298 = vmatpush2.msra.mxu0 0.0
    %299 = vmatprep.subr.mxu0 0.0
    %300 = vmatpush2.msra.mxu0 0.0
    %301 = vmatprep.subr.mxu0 0.0
    %302 = vmatpush2.msra.mxu0 0.0
    %303 = vmatprep.subr.mxu0 0.0
    %304 = vmatpush2.msra.mxu0 0.0
    %305 = vmatprep.subr.mxu0 0.0
    %306 = vmatpush2.msra.mxu0 0.0
    %307 = vmatprep.mubr.f32.mxu0 0.0
    %308 = vmatmul.mubr.f32.gmra.mxu0 %v241
    %v309 = vpop.f32.mrf.mxu0
    %v310 = vadd.f32 0.0, %v309
    %v311 = vpop.f32.mrf.mxu0
    %312 = vdwg.mxu0
    %v313 = vadd.f32 %v156, %v310
    %vm314 = vcmp.gt.f32.partialorder %v313, 0.0
    %v315 = vmin.f32 %v313, 0.0
    %v316 = vmul.f32 %v315, 1.442695
    %v317 = vpow.pop %v316
    %v318 = vsub.f32 %v317, 1.0
    %v319 = vsel %vm314, %v313, %v318
    %s320 = scalar_lea.vmem [#allocation5], 32
    %v321 = vld [vmem:[%s320] sm:$0xff]
    %v322 = vld [vmem:[%s320 + $0x8] sm:$0xff]
    %v323 = vld [vmem:[%s320 + $0x10] sm:$0xff]
    %v324 = vld [vmem:[%s320 + $0x18] sm:$0xff]
    %v326 = vsel %vm239, %v319, 0
    %328 = vmatprep.subr.mxu0 0.0
    %329 = vmatpush1.msra.mxu0 0.0
    %330 = vmatprep.subr.mxu0 0.0
    %331 = vmatpush1.msra.mxu0 0.0
    %332 = vmatprep.subr.mxu0 0.0
    %333 = vmatpush1.msra.mxu0 0.0
    %334 = vmatprep.subr.mxu0 0.0
    %335 = vmatpush1.msra.mxu0 0.0
    %336 = vmatprep.subr.mxu0 0.0
    %337 = vmatpush1.msra.mxu0 0.0
    %338 = vmatprep.subr.mxu0 0.0
    %339 = vmatpush1.msra.mxu0 0.0
    %340 = vmatprep.subr.mxu0 0.0
    %341 = vmatpush1.msra.mxu0 0.0
    %342 = vmatprep.subr.mxu0 0.0
    %343 = vmatpush1.msra.mxu0 0.0
    %344 = vmatprep.subr.mxu0 0.0
    %345 = vmatpush1.msra.mxu0 0.0
    %346 = vmatprep.subr.mxu0 0.0
    %347 = vmatpush1.msra.mxu0 0.0
    %348 = vmatprep.subr.mxu0 0.0
    %349 = vmatpush1.msra.mxu0 0.0
    %350 = vmatprep.subr.mxu0 0.0
    %351 = vmatpush1.msra.mxu0 0.0
    %352 = vmatprep.subr.mxu0 0.0
    %353 = vmatpush1.msra.mxu0 %v324
    %354 = vmatprep.subr.mxu0 0.0
    %355 = vmatpush1.msra.mxu0 %v323
    %356 = vmatprep.subr.mxu0 0.0
    %357 = vmatpush1.msra.mxu0 %v322
    %358 = vmatprep.subr.mxu0 0.0
    %359 = vmatpush1.msra.mxu0 %v321
    %360 = vmatprep.subr.mxu0 0.0
    %361 = vmatpush2.msra.mxu0 0.0
    %362 = vmatprep.subr.mxu0 0.0
    %363 = vmatpush2.msra.mxu0 0.0
    %364 = vmatprep.subr.mxu0 0.0
    %365 = vmatpush2.msra.mxu0 0.0
    %366 = vmatprep.subr.mxu0 0.0
    %367 = vmatpush2.msra.mxu0 0.0
    %368 = vmatprep.subr.mxu0 0.0
    %369 = vmatpush2.msra.mxu0 0.0
    %370 = vmatprep.subr.mxu0 0.0
    %371 = vmatpush2.msra.mxu0 0.0
    %372 = vmatprep.subr.mxu0 0.0
    %373 = vmatpush2.msra.mxu0 0.0
    %374 = vmatprep.subr.mxu0 0.0
    %375 = vmatpush2.msra.mxu0 0.0
    %376 = vmatprep.subr.mxu0 0.0
    %377 = vmatpush2.msra.mxu0 0.0
    %378 = vmatprep.subr.mxu0 0.0
    %379 = vmatpush2.msra.mxu0 0.0
    %380 = vmatprep.subr.mxu0 0.0
    %381 = vmatpush2.msra.mxu0 0.0
    %382 = vmatprep.subr.mxu0 0.0
    %383 = vmatpush2.msra.mxu0 0.0
    %384 = vmatprep.subr.mxu0 0.0
    %385 = vmatpush2.msra.mxu0 0.0
    %386 = vmatprep.subr.mxu0 0.0
    %387 = vmatpush2.msra.mxu0 0.0
    %388 = vmatprep.subr.mxu0 0.0
    %389 = vmatpush2.msra.mxu0 0.0
    %390 = vmatprep.subr.mxu0 0.0
    %391 = vmatpush2.msra.mxu0 0.0
    %392 = vmatprep.mubr.f32.mxu0 0.0
    %393 = vmatmul.mubr.f32.gmra.mxu0 %v326
    %v394 = vpop.f32.mrf.mxu0
    %v395 = vadd.f32 0.0, %v394
    %v396 = vpop.f32.mrf.mxu0
    %397 = vdwg.mxu0
    %v398 = vadd.f32 %v225, %v395
    %vm399 = vcmp.gt.f32.partialorder %v398, 0.0
    %v400 = vmin.f32 %v398, 0.0
    %v401 = vmul.f32 %v400, 1.442695
    %v402 = vpow.pop %v401
    %v403 = vsub.f32 %v402, 1.0
    %v404 = vsel %vm399, %v398, %v403
    %v405 = vld [vmem:[%s4] sm:$0xff]
    %v406 = vld [vmem:[%s4 + $0x8] sm:$0xff]
    %v407 = vld [vmem:[%s4 + $0x10] sm:$0xff]
    %v408 = vld [vmem:[%s4 + $0x18] sm:$0xff]
    %v410 = vsel %vm239, %v404, 0
    %412 = vmatprep.subr.mxu0 0.0
    %413 = vmatpush1.msra.mxu0 0.0
    %414 = vmatprep.subr.mxu0 0.0
    %415 = vmatpush1.msra.mxu0 0.0
    %416 = vmatprep.subr.mxu0 0.0
    %417 = vmatpush1.msra.mxu0 0.0
    %418 = vmatprep.subr.mxu0 0.0
    %419 = vmatpush1.msra.mxu0 0.0
    %420 = vmatprep.subr.mxu0 0.0
    %421 = vmatpush1.msra.mxu0 0.0
    %422 = vmatprep.subr.mxu0 0.0
    %423 = vmatpush1.msra.mxu0 0.0
    %424 = vmatprep.subr.mxu0 0.0
    %425 = vmatpush1.msra.mxu0 0.0
    %426 = vmatprep.subr.mxu0 0.0
    %427 = vmatpush1.msra.mxu0 0.0
    %428 = vmatprep.subr.mxu0 0.0
    %429 = vmatpush1.msra.mxu0 0.0
    %430 = vmatprep.subr.mxu0 0.0
    %431 = vmatpush1.msra.mxu0 0.0
    %432 = vmatprep.subr.mxu0 0.0
    %433 = vmatpush1.msra.mxu0 0.0
    %434 = vmatprep.subr.mxu0 0.0
    %435 = vmatpush1.msra.mxu0 0.0
    %436 = vmatprep.subr.mxu0 0.0
    %437 = vmatpush1.msra.mxu0 %v408
    %438 = vmatprep.subr.mxu0 0.0
    %439 = vmatpush1.msra.mxu0 %v407
    %440 = vmatprep.subr.mxu0 0.0
    %441 = vmatpush1.msra.mxu0 %v406
    %442 = vmatprep.subr.mxu0 0.0
    %443 = vmatpush1.msra.mxu0 %v405
    %444 = vmatprep.subr.mxu0 0.0
    %445 = vmatpush2.msra.mxu0 0.0
    %446 = vmatprep.subr.mxu0 0.0
    %447 = vmatpush2.msra.mxu0 0.0
    %448 = vmatprep.subr.mxu0 0.0
    %449 = vmatpush2.msra.mxu0 0.0
    %450 = vmatprep.subr.mxu0 0.0
    %451 = vmatpush2.msra.mxu0 0.0
    %452 = vmatprep.subr.mxu0 0.0
    %453 = vmatpush2.msra.mxu0 0.0
    %454 = vmatprep.subr.mxu0 0.0
    %455 = vmatpush2.msra.mxu0 0.0
    %456 = vmatprep.subr.mxu0 0.0
    %457 = vmatpush2.msra.mxu0 0.0
    %458 = vmatprep.subr.mxu0 0.0
    %459 = vmatpush2.msra.mxu0 0.0
    %460 = vmatprep.subr.mxu0 0.0
    %461 = vmatpush2.msra.mxu0 0.0
    %462 = vmatprep.subr.mxu0 0.0
    %463 = vmatpush2.msra.mxu0 0.0
    %464 = vmatprep.subr.mxu0 0.0
    %465 = vmatpush2.msra.mxu0 0.0
    %466 = vmatprep.subr.mxu0 0.0
    %467 = vmatpush2.msra.mxu0 0.0
    %468 = vmatprep.subr.mxu0 0.0
    %469 = vmatpush2.msra.mxu0 0.0
    %470 = vmatprep.subr.mxu0 0.0
    %471 = vmatpush2.msra.mxu0 0.0
    %472 = vmatprep.subr.mxu0 0.0
    %473 = vmatpush2.msra.mxu0 0.0
    %474 = vmatprep.subr.mxu0 0.0
    %475 = vmatpush2.msra.mxu0 0.0
    %476 = vmatprep.mubr.f32.mxu0 0.0
    %477 = vmatmul.mubr.f32.gmra.mxu0 %v410
    %v478 = vpop.f32.mrf.mxu0
    %v479 = vadd.f32 0.0, %v478
    %v480 = vpop.f32.mrf.mxu0
    %481 = vdwg.mxu0
    %v482 = vadd.f32 %v227, %v479
    %vm483 = vcmask 130048
    %484 = vst.msk [vmem:[#allocation7] sm:$0xff] %vm483, %v482
    %v485 = vld [vmem:[%s1] sm:$0xff]
    %v486 = vmul.f32 %v485, 0.3
    %v487 = vadd.f32 %v482, %v486
    %489 = vrot.lane.b32.xlu0 %v487, 16
    %v490 = vpop.permute.xlu0 %489
    %vm492 = vcmask 261248
    %493 = vst.msk [vmem:[#allocation7] sm:$0xff] %vm492, %v490
    // Predicated region
    $region30: #{tpu_custom_call.1} parent=1 // pred_check
      _
    $region31: #{tpu_custom_call.1} parent=1 // pred_check_branch
      %495 = sbr.rel (0) target = $region33
    $region32: #{tpu_custom_call.1} parent=1 // pred_region
      %s497 = ssub.s32 128, 128
      %498 = vsyncadd [#allocation4], %s497
      %s500 = sshll.u32 [#allocation7], 4
      %s501 = int_to_ptr.vmem [resolvable:$true] %s500
      %503 = dma.vmem_to_hbm [thread:$0]  %s501, 128, %s5, [#allocation4]
    $region33: #{tpu_custom_call.1} parent=1 // pred_fallthru
      _
    // Predicated region
    $region34: #{tpu_custom_call.1} parent=1 // pred_check
      _
    $region35: #{tpu_custom_call.1} parent=1 // pred_check_branch
      %505 = sbr.rel (0) target = $region37
    $region36: #{tpu_custom_call.1} parent=1 // pred_region
      %506 = dma.done [#allocation4], 128
    $region37: #{tpu_custom_call.1} parent=1 // pred_fallthru
      _
    %507 = vsyncpa [#allocation3], 1
    %508 = vsyncpa [#allocation6], 1
    %509 = vsyncpa [#allocation4], 1

</llo_original>
